<compile_context>
chip_gen: v7x
topology: tpu7x:2x2x1
jax: 0.10.0
libtpu: 0.0.40
codegen_flags: <defaults>
</compile_context>

<pallas_src>
import math

import jax
import jax.numpy as jnp
from jax.experimental import pallas as pl
from jax.experimental.pallas import tpu as pltpu


# --------------------------------------------------------------------------
# Kernel
# --------------------------------------------------------------------------
def _variable_linear_kernel(u_ref, wf_ref, bf_ref, wm_ref, bm_ref, out_ref):
    # First stage: the four sliced factor_u_l1 / factor_u_l2 projections,
    # fused column-wise into a single weight in the wrapper.
    h = jnp.dot(u_ref[...], wf_ref[...], preferred_element_type=jnp.float32)
    h = h + bf_ref[...]
    # Second stage: factor_u_merge.
    out = jnp.dot(h, wm_ref[...], preferred_element_type=jnp.float32)
    out = out + bm_ref[...]
    out_ref[...] = out.astype(out_ref.dtype)


# --------------------------------------------------------------------------
# Wrapper
# --------------------------------------------------------------------------
def _choose_row_tile(n_rows, l_u, r, itemsize):
    """Pick a row-batch TR: as large as a modest VMEM budget allows, multiple
    of 8, and preferring >= 2 grid steps so both v7x TensorCores get work."""
    budget = 8 << 20                                 # per double-buffered in+out pair
    per_row = 2 * (l_u + r) * itemsize
    tr = max(8, (budget // max(per_row, 1)) // 8 * 8)
    tr = min(tr, 1024)
    rows_up = -(-n_rows // 8) * 8
    tr = min(tr, rows_up)
    if rows_up >= 16 and rows_up // tr < 2:          # keep >= 2 grid steps
        tr = max(8, (rows_up // 2) // 8 * 8)
    return tr


def variable_linear_pallas(z, params, *, crop_size, low_rank):
    """z: [..., n_res] -> [..., low_rank], matching VariableLinear.forward."""
    w1, b1 = params["w1"], params["b1"]      # (crop_size, r/4), (r/4,)
    w2, b2 = params["w2"], params["b2"]      # (crop_size//2, r/4), (r/4,)
    wm, bm = params["wm"], params["bm"]      # (r, r), (r,)

    n_res = z.shape[-1]
    lead = z.shape[:-1]
    r = low_rank
    q = r // 4
    half = crop_size // 2

    # ---- replicate the module's padding / stride logic (static Python) ----
    if n_res < crop_size:
        l_pad = int((crop_size - n_res) / 2)
        pad_cfg = [(0, 0)] * (z.ndim - 1) + [(l_pad, l_pad + 1)]
        u = jnp.pad(z, pad_cfg, mode="constant", constant_values=0)
    else:
        u = z
    stride1 = n_res - crop_size if crop_size < n_res else 0
    stride2 = n_res - half if n_res > half else 0
    L = u.shape[-1]

    # ---- fuse the four sliced first-stage projections column-wise ---------
    wf = jnp.zeros((L, r), dtype=w1.dtype)
    wf = wf.at[0:crop_size, 0:q].set(w1)                      # u1 = L1(u[:crop])
    wf = wf.at[stride1:stride1 + crop_size, q:2 * q].set(w1)  # u2 = L1(u[s:s+crop])
    wf = wf.at[0:half, 2 * q:3 * q].set(w2)                   # u3 = L2(u[:crop/2])
    wf = wf.at[stride2:stride2 + half, 3 * q:4 * q].set(w2)   # u4 = L2(u[s2:s2+crop/2])
    bf = jnp.concatenate([b1, b1, b2, b2]).reshape(1, r)
    bm2 = bm.reshape(1, r)

    # ---- flatten rows, pick a row tile, pad remainder ----------------------
    R = math.prod(lead) if lead else 1
    u_flat = u.reshape(R, L)
    itemsize = jnp.dtype(z.dtype).itemsize
    TR = _choose_row_tile(R, L, r, itemsize)
    R_pad = pl.cdiv(R, TR) * TR
    if R_pad != R:
        u_flat = jnp.pad(u_flat, ((0, R_pad - R), (0, 0)))

    grid_steps = R_pad // TR

    # Generation-safe scoped-VMEM limit (stays <= 48 MiB so it also fits v7x's
    # 64 MiB physical VMEM; v5e/v6e have 128 MiB).
    block_bytes = itemsize * (2 * TR * (L + r) + 2 * (L * r + r * r + 2 * r))
    vmem_limit = int(min(max(4 * block_bytes, 32 * 1024 * 1024), 48 * 1024 * 1024))

    full = lambda shape: pl.BlockSpec(shape, lambda i: tuple(0 for _ in shape))

    out = pl.pallas_call(
        _variable_linear_kernel,
        out_shape=jax.ShapeDtypeStruct((R_pad, r), z.dtype),
        grid_spec=pltpu.PrefetchScalarGridSpec(
            num_scalar_prefetch=0,
            grid=(grid_steps,),
            in_specs=[
                pl.BlockSpec((TR, L), lambda i: (i, 0)),   # u rows
                full((L, r)),                              # fused first-stage W
                full((1, r)),                              # fused first-stage b
                full((r, r)),                              # merge W
                full((1, r)),                              # merge b
            ],
            out_specs=pl.BlockSpec((TR, r), lambda i: (i, 0)),
        ),
        compiler_params=pltpu.CompilerParams(
            dimension_semantics=("parallel",),
            vmem_limit_bytes=vmem_limit,
        ),
    )(u_flat, wf, bf, wm, bm2)

    return out[:R].reshape(lead + (r,))


# --------------------------------------------------------------------------
# Pure-JAX reference (mirrors the torch forward, unfused)
# --------------------------------------------------------------------------
def variable_linear_ref(z, params, *, crop_size, low_rank):
    w1, b1 = params["w1"], params["b1"]
    w2, b2 = params["w2"], params["b2"]
    wm, bm = params["wm"], params["bm"]

    n_res = z.shape[-1]
    half = crop_size // 2
    if n_res < crop_size:
        l_pad = int((crop_size - n_res) / 2)
        pad_cfg = [(0, 0)] * (z.ndim - 1) + [(l_pad, l_pad + 1)]
        u = jnp.pad(z, pad_cfg, mode="constant", constant_values=0)
    else:
        u = z
    stride = n_res - crop_size if crop_size < n_res else 0
    u1 = u[..., :crop_size] @ w1 + b1
    u2 = u[..., stride:stride + crop_size] @ w1 + b1
    stride = n_res - half if n_res > half else 0
    u3 = u[..., :half] @ w2 + b2
    u4 = u[..., stride:stride + half] @ w2 + b2
    tu = jnp.concatenate([u1, u2, u3, u4], axis=-1)
    return tu @ wm + bm


# --------------------------------------------------------------------------
# Test
# --------------------------------------------------------------------------
if __name__ == "__main__":
    # Constructor args: n_res (crop_size) and low_rank r.
    crop_size = 128
    low_rank = 128                       # r (multiple of 4); output last dim
    B, M = 2, 8                          # leading batch dims -> 16 rows
    n_res_in = 144                       # > crop_size -> exercises the stride path

    key = jax.random.PRNGKey(0)
    keys = jax.random.split(key, 7)

    z = jax.random.normal(keys[0], (B, M, n_res_in), dtype=jnp.float32)

    q = low_rank // 4

    # Weights stored as (in_dim, out_dim) (transposed vs torch nn.Linear).
    # NOTE: the module initializes biases to 0; we use small random biases so
    # the kernel exercises the bias path non-trivially.
    def lecun(k, shape):
        fan_in = shape[0]
        return jax.random.normal(k, shape, dtype=jnp.float32) / jnp.sqrt(fan_in)

    params = {
        "w1": lecun(keys[1], (crop_size, q)),
        "b1": 0.1 * jax.random.normal(keys[2], (q,), dtype=jnp.float32),
        "w2": lecun(keys[3], (crop_size // 2, q)),
        "b2": 0.1 * jax.random.normal(keys[4], (q,), dtype=jnp.float32),
        "wm": lecun(keys[5], (low_rank, low_rank)),
        "bm": 0.1 * jax.random.normal(keys[6], (low_rank,), dtype=jnp.float32),
    }

    out = variable_linear_pallas(z, params, crop_size=crop_size, low_rank=low_rank)
    out = jax.block_until_ready(out)

    ref = variable_linear_ref(z, params, crop_size=crop_size, low_rank=low_rank)

    assert out.shape == (B, M, low_rank), out.shape
    assert jnp.allclose(out, ref, atol=1e-4, rtol=1e-4), "mismatch vs pure-JAX reference"

    print("KERNEL_OK")
</pallas_src>

<mosaic_0001>
module attributes {stable_mosaic.version = 11 : i64} {
  func.func @_variable_linear_kernel(%arg0: i32, %arg1: memref<8x144xf32, #tpu.memory_space<vmem>>, %arg2: memref<144x128xf32, #tpu.memory_space<vmem>>, %arg3: memref<1x128xf32, #tpu.memory_space<vmem>>, %arg4: memref<128x128xf32, #tpu.memory_space<vmem>>, %arg5: memref<1x128xf32, #tpu.memory_space<vmem>>, %arg6: memref<8x128xf32, #tpu.memory_space<vmem>>) attributes {dimension_semantics = [#tpu.dimension_semantics<parallel>], iteration_bounds = array<i64: 2>, scalar_prefetch = 0 : i64, scratch_operands = 0 : i64, tpu.core_type = #tpu.core_type<tc>, window_params = [{transform_indices = @transform_0, window_bounds = array<i64: 8, 144>}, {pipeline_mode = #tpu.pipeline_mode<synchronous>, transform_indices = @transform_1, window_bounds = array<i64: 144, 128>}, {pipeline_mode = #tpu.pipeline_mode<synchronous>, transform_indices = @transform_2, window_bounds = array<i64: 1, 128>}, {pipeline_mode = #tpu.pipeline_mode<synchronous>, transform_indices = @transform_3, window_bounds = array<i64: 128, 128>}, {pipeline_mode = #tpu.pipeline_mode<synchronous>, transform_indices = @transform_4, window_bounds = array<i64: 1, 128>}, {transform_indices = @transform_5, window_bounds = array<i64: 8, 128>}]} {
    %c0 = arith.constant 0 : index
    %c0_0 = arith.constant 0 : index
    %0 = vector.load %arg1[%c0, %c0_0] : memref<8x144xf32, #tpu.memory_space<vmem>>, vector<8x144xf32>
    %c0_1 = arith.constant 0 : index
    %c0_2 = arith.constant 0 : index
    %1 = vector.load %arg2[%c0_1, %c0_2] : memref<144x128xf32, #tpu.memory_space<vmem>>, vector<144x128xf32>
    %cst = arith.constant dense<0.000000e+00> : vector<8x128xf32>
    %2 = tpu.matmul %0, %1, %cst {dimension_numbers = #tpu.dot_dimension_numbers<[1], [0], [0], [1], [0, 0, 1, 1], [], []>} : vector<8x144xf32>, vector<144x128xf32>, vector<8x128xf32> -> vector<8x128xf32>
    %c0_3 = arith.constant 0 : index
    %c0_4 = arith.constant 0 : index
    %3 = vector.load %arg3[%c0_3, %c0_4] : memref<1x128xf32, #tpu.memory_space<vmem>>, vector<1x128xf32>
    %4 = vector.broadcast %3 : vector<1x128xf32> to vector<8x128xf32>
    %5 = arith.addf %2, %4 : vector<8x128xf32>
    %c0_5 = arith.constant 0 : index
    %c0_6 = arith.constant 0 : index
    %6 = vector.load %arg4[%c0_5, %c0_6] : memref<128x128xf32, #tpu.memory_space<vmem>>, vector<128x128xf32>
    %cst_7 = arith.constant dense<0.000000e+00> : vector<8x128xf32>
    %7 = tpu.matmul %5, %6, %cst_7 {dimension_numbers = #tpu.dot_dimension_numbers<[1], [0], [0], [1], [0, 0, 1, 1], [], []>} : vector<8x128xf32>, vector<128x128xf32>, vector<8x128xf32> -> vector<8x128xf32>
    %c0_8 = arith.constant 0 : index
    %c0_9 = arith.constant 0 : index
    %8 = vector.load %arg5[%c0_8, %c0_9] : memref<1x128xf32, #tpu.memory_space<vmem>>, vector<1x128xf32>
    %9 = vector.broadcast %8 : vector<1x128xf32> to vector<8x128xf32>
    %10 = arith.addf %7, %9 : vector<8x128xf32>
    %c0_10 = arith.constant 0 : index
    %c0_11 = arith.constant 0 : index
    %11 = vector.load %arg6[%c0_10, %c0_11] : memref<8x128xf32, #tpu.memory_space<vmem>>, vector<8x128xf32>
    tpu.vector_store %arg6[%c0_10, %c0_11], %10 {strides = array<i32>} : memref<8x128xf32, #tpu.memory_space<vmem>>, vector<8x128xf32>,
    return
  }
  func.func @transform_0(%arg0: i32) -> (i32, i32) {
    %c0_i32 = arith.constant 0 : i32
    %c0_i32_0 = arith.constant 0 : i32
    return %arg0, %c0_i32 : i32, i32
  }
  func.func @transform_1(%arg0: i32) -> (i32, i32) {
    %c0_i32 = arith.constant 0 : i32
    %c0_i32_0 = arith.constant 0 : i32
    %c0_i32_1 = arith.constant 0 : i32
    return %c0_i32, %c0_i32_0 : i32, i32
  }
  func.func @transform_2(%arg0: i32) -> (i32, i32) {
    %c0_i32 = arith.constant 0 : i32
    %c0_i32_0 = arith.constant 0 : i32
    %c0_i32_1 = arith.constant 0 : i32
    return %c0_i32, %c0_i32_0 : i32, i32
  }
  func.func @transform_3(%arg0: i32) -> (i32, i32) {
    %c0_i32 = arith.constant 0 : i32
    %c0_i32_0 = arith.constant 0 : i32
    %c0_i32_1 = arith.constant 0 : i32
    return %c0_i32, %c0_i32_0 : i32, i32
  }
  func.func @transform_4(%arg0: i32) -> (i32, i32) {
    %c0_i32 = arith.constant 0 : i32
    %c0_i32_0 = arith.constant 0 : i32
    %c0_i32_1 = arith.constant 0 : i32
    return %c0_i32, %c0_i32_0 : i32, i32
  }
  func.func @transform_5(%arg0: i32) -> (i32, i32) {
    %c0_i32 = arith.constant 0 : i32
    %c0_i32_0 = arith.constant 0 : i32
    return %arg0, %c0_i32 : i32, i32
  }
}

</mosaic_0001>

<llo_original>
// kernel: tpu_custom_call.1
$region0: #{tpu_custom_call.1}
  #allocation0 [shape = 'u32[]', space=smem, size = 0x4, offset = 0x4, fixed_abs, tag = 'smem constant byte address 0x4 - core index']
  #allocation1 [shape = 'u32[144,128]{1,0:T(1,128)}', space=vmem, size = 0x12000, scoped, tag = 'internal scratch']
  %s0 = inlined_call_operand.hbm [shape: f32[16,144], index: 0, kind: input, shape index: {}]
  %s1 = inlined_call_operand.hbm [shape: f32[144,128], index: 1, kind: input, shape index: {}]
  %s2 = inlined_call_operand.vmem [shape: f32[1,128], index: 2, kind: input, shape index: {}]
  %s3 = inlined_call_operand.hbm [shape: f32[128,128], index: 3, kind: input, shape index: {}]
  %s4 = inlined_call_operand.vmem [shape: f32[1,128], index: 4, kind: input, shape index: {}]
  %s5 = inlined_call_operand.hbm [shape: f32[16,128], index: 5, kind: output, shape index: {}]
  %s6 = sld [smem:[#allocation0]]
  $region65: #{tpu_custom_call.1} parent=0
    _
  %s8 = ssub.s32 1, %s6
  %s9 = scalar_select 0, %s8, %s6
  $region1: #{tpu_custom_call.1} parent=0
    #allocation2 [shape = 'u8[16384]{0}', space=vmem, size = 0x4000, scoped, tag = 'input window, operand 0']
    #allocation3 [shape = 's32[2]{0}', space=sflag, size = 0x8, scoped, tag = 'scoped memory for tpu_custom_call.1']
    #allocation4 [shape = 's32[2]{0}', space=sflag, size = 0x8, scoped, tag = 'scoped memory for tpu_custom_call.1']
    #allocation5 [shape = 'u8[73728]{0}', space=vmem, size = 0x12000, scoped, tag = 'input window, operand 1, single buffered']
    #allocation6 [shape = 's32[1]{0}', space=sflag, size = 0x4, scoped, tag = 'scoped memory for tpu_custom_call.1']
    #allocation7 [shape = 'u8[65536]{0}', space=vmem, size = 0x10000, scoped, tag = 'input window, operand 3, single buffered']
    #allocation8 [shape = 'u8[8192]{0}', space=vmem, size = 0x2000, scoped, tag = 'output window, operand 0']
    %10 = vsyncpa [#allocation3], 0
    %s11 = scalar_lea.sflag [#allocation3], 1
    %12 = vsyncpa %s11, 0
    %13 = vsyncpa [#allocation6], 0
    %14 = vsyncpa [#allocation4], 0
    %s15 = scalar_lea.sflag [#allocation4], 1
    %16 = vsyncpa %s15, 0
    loop: start=0, step=1, limit=4
    $region2: #{tpu_custom_call.1} parent=1 // loop_pre_header
      _
    $region3: #{tpu_custom_call.1} parent=1 // loop_header
      %s18 = sphi 0, %s22
      %p19 = scmp.ge.s32.totalorder %s18, 4
      %s28 = sphi 0, %s30
      %s31 = sphi 0, %s28
      %s32 = sphi 0, %s31
      %s48 = sphi 0, %s32
      %s52 = sphi 0, %s52
      %s54 = sphi 0, %s52
      %s55 = sphi 0, %s54
      %s69 = sphi 0, %s55
      %s73 = sphi 0, %s73
      %s75 = sphi 0, %s73
      %s76 = sphi 0, %s75
      %s90 = sphi 0, %s76
      %s94 = sphi 0, %s94
      %s96 = sphi 0, %s94
      %s97 = sphi 0, %s96
      %s111 = sphi 0, %s97
      %s115 = sphi 0, %s115
      %s117 = sphi 0, %s115
      %s118 = sphi 0, %s117
      %s132 = sphi 0, %s118
      %s138 = sphi 0, %s140
      %s141 = sphi 0, %s138
      %s142 = sphi 0, %s141
      %s158 = sphi 0, %s142
    $region4: #{tpu_custom_call.1} parent=1 // loop_header_branch
      %21 = sbr.rel (%p19) target = $region8
    $region5: #{tpu_custom_call.1} parent=1 // loop_body
      %s23 = ssub.s32 %s18, 1
      %s24 = ssub.s32 %s18, 2
      %s25 = sadd.s32 %s18, 1
      %s26 = ssub.s32 %s18, %s25
      %p27 = scmp.eq.s32.totalorder %s26, 0
      %s29 = sadd.s32 %s28, 1
      %s30 = scalar_select %p27, %s28, %s29
      %p33 = pneg %p27
      %p34 = scmp.eq.s32.totalorder %s18, 1
      %p35 = por %p33, %p34
      %p36 = scmp.ne.s32.totalorder %s28, %s31
      %p37 = scmp.eq.s32.totalorder %s18, 0
      %p38 = por %p36, %p37
      %p39 = scmp.ne.s32.totalorder %s28, %s31
      %p40 = scmp.eq.s32.totalorder %s23, 1
      %p41 = por %p39, %p40
      %p42 = scmp.ne.s32.totalorder %s31, %s32
      %p43 = scmp.eq.s32.totalorder %s23, 0
      %p44 = por %p42, %p43
      %p45 = scmp.ne.s32.totalorder %s31, %s32
      %p46 = scmp.eq.s32.totalorder %s24, 1
      %p47 = por %p45, %p46
      %p49 = scmp.ne.s32.totalorder %s32, %s48
      %p50 = scmp.eq.s32.totalorder %s24, 0
      %p51 = por %p49, %p50
      %s53 = sadd.s32 %s52, 1
      %p56 = scmp.eq.s32.totalorder %s18, 1
      %p57 = scmp.ne.s32.totalorder %s52, %s54
      %p58 = scmp.eq.s32.totalorder %s18, 0
      %p59 = por %p57, %p58
      %p60 = scmp.ne.s32.totalorder %s52, %s54
      %p61 = scmp.eq.s32.totalorder %s23, 1
      %p62 = por %p60, %p61
      %p63 = scmp.ne.s32.totalorder %s54, %s55
      %p64 = scmp.eq.s32.totalorder %s23, 0
      %p65 = por %p63, %p64
      %p66 = scmp.ne.s32.totalorder %s54, %s55
      %p67 = scmp.eq.s32.totalorder %s24, 1
      %p68 = por %p66, %p67
      %p70 = scmp.ne.s32.totalorder %s55, %s69
      %p71 = scmp.eq.s32.totalorder %s24, 0
      %p72 = por %p70, %p71
      %s74 = sadd.s32 %s73, 1
      %p77 = scmp.eq.s32.totalorder %s18, 1
      %p78 = scmp.ne.s32.totalorder %s73, %s75
      %p79 = scmp.eq.s32.totalorder %s18, 0
      %p80 = por %p78, %p79
      %p81 = scmp.ne.s32.totalorder %s73, %s75
      %p82 = scmp.eq.s32.totalorder %s23, 1
      %p83 = por %p81, %p82
      %p84 = scmp.ne.s32.totalorder %s75, %s76
      %p85 = scmp.eq.s32.totalorder %s23, 0
      %p86 = por %p84, %p85
      %p87 = scmp.ne.s32.totalorder %s75, %s76
      %p88 = scmp.eq.s32.totalorder %s24, 1
      %p89 = por %p87, %p88
      %p91 = scmp.ne.s32.totalorder %s76, %s90
      %p92 = scmp.eq.s32.totalorder %s24, 0
      %p93 = por %p91, %p92
      %s95 = sadd.s32 %s94, 1
      %p98 = scmp.eq.s32.totalorder %s18, 1
      %p99 = scmp.ne.s32.totalorder %s94, %s96
      %p100 = scmp.eq.s32.totalorder %s18, 0
      %p101 = por %p99, %p100
      %p102 = scmp.ne.s32.totalorder %s94, %s96
      %p103 = scmp.eq.s32.totalorder %s23, 1
      %p104 = por %p102, %p103
      %p105 = scmp.ne.s32.totalorder %s96, %s97
      %p106 = scmp.eq.s32.totalorder %s23, 0
      %p107 = por %p105, %p106
      %p108 = scmp.ne.s32.totalorder %s96, %s97
      %p109 = scmp.eq.s32.totalorder %s24, 1
      %p110 = por %p108, %p109
      %p112 = scmp.ne.s32.totalorder %s97, %s111
      %p113 = scmp.eq.s32.totalorder %s24, 0
      %p114 = por %p112, %p113
      %s116 = sadd.s32 %s115, 1
      %p119 = scmp.eq.s32.totalorder %s18, 1
      %p120 = scmp.ne.s32.totalorder %s115, %s117
      %p121 = scmp.eq.s32.totalorder %s18, 0
      %p122 = por %p120, %p121
      %p123 = scmp.ne.s32.totalorder %s115, %s117
      %p124 = scmp.eq.s32.totalorder %s23, 1
      %p125 = por %p123, %p124
      %p126 = scmp.ne.s32.totalorder %s117, %s118
      %p127 = scmp.eq.s32.totalorder %s23, 0
      %p128 = por %p126, %p127
      %p129 = scmp.ne.s32.totalorder %s117, %s118
      %p130 = scmp.eq.s32.totalorder %s24, 1
      %p131 = por %p129, %p130
      %p133 = scmp.ne.s32.totalorder %s118, %s132
      %p134 = scmp.eq.s32.totalorder %s24, 0
      %p135 = por %p133, %p134
      %s136 = ssub.s32 %s18, %s25
      %p137 = scmp.eq.s32.totalorder %s136, 0
      %s139 = sadd.s32 %s138, 1
      %s140 = scalar_select %p137, %s138, %s139
      %p143 = pneg %p137
      %p144 = scmp.eq.s32.totalorder %s18, 1
      %p145 = por %p143, %p144
      %p146 = scmp.ne.s32.totalorder %s138, %s141
      %p147 = scmp.eq.s32.totalorder %s18, 0
      %p148 = por %p146, %p147
      %p149 = scmp.ne.s32.totalorder %s138, %s141
      %p150 = scmp.eq.s32.totalorder %s23, 1
      %p151 = por %p149, %p150
      %p152 = scmp.ne.s32.totalorder %s141, %s142
      %p153 = scmp.eq.s32.totalorder %s23, 0
      %p154 = por %p152, %p153
      %p155 = scmp.ne.s32.totalorder %s141, %s142
      %p156 = scmp.eq.s32.totalorder %s24, 1
      %p157 = por %p155, %p156
      %p159 = scmp.ne.s32.totalorder %s142, %s158
      %p160 = scmp.eq.s32.totalorder %s24, 0
      %p161 = por %p159, %p160
      %p162 = scmp.le.s32.totalorder 1, %s18
      %p163 = scmp.lt.s32.totalorder %s18, 3
      %p164 = pnand %p162, %p163
      %p165 = pneg %p164
      // Predicated region
      $region9: #{tpu_custom_call.1} parent=5 // pred_check
        _
      $region10: #{tpu_custom_call.1} parent=5 // pred_check_branch
        %167 = sbr.rel (%p164) target = $region12
      $region11: #{tpu_custom_call.1} parent=5 // pred_region
        %s168 = ssub.s32 %s18, 1
        // Predicated region
        $region13: #{tpu_custom_call.1} parent=11 // pred_check
          %p169 = pneg %p65
        $region14: #{tpu_custom_call.1} parent=11 // pred_check_branch
          %171 = sbr.rel (%p169) target = $region16
        $region15: #{tpu_custom_call.1} parent=11 // pred_region
          %s173 = ssub.s32 2304, 2304
          %174 = vsyncadd [#allocation6], %s173
          %s175 = sshll.u32 [#allocation5], 4
          %s176 = int_to_ptr.vmem [resolvable:$true] %s175
          %181 = dma.hbm_to_vmem [thread:$0]  %s1, 2304, %s176, [#allocation6], 128, 128, 8
        $region16: #{tpu_custom_call.1} parent=11 // pred_fallthru
          _
        // Predicated region
        $region17: #{tpu_custom_call.1} parent=11 // pred_check
          %p182 = pneg %p86
        $region18: #{tpu_custom_call.1} parent=11 // pred_check_branch
          %184 = sbr.rel (%p182) target = $region20
        $region19: #{tpu_custom_call.1} parent=11 // pred_region
          _
        $region20: #{tpu_custom_call.1} parent=11 // pred_fallthru
          _
        // Predicated region
        $region21: #{tpu_custom_call.1} parent=11 // pred_check
          %p185 = pneg %p107
        $region22: #{tpu_custom_call.1} parent=11 // pred_check_branch
          %187 = sbr.rel (%p185) target = $region24
        $region23: #{tpu_custom_call.1} parent=11 // pred_region
          %s189 = ssub.s32 2048, 2048
          %190 = vsyncadd [#allocation6], %s189
          %s191 = sshll.u32 [#allocation7], 4
          %s192 = int_to_ptr.vmem [resolvable:$true] %s191
          %197 = dma.hbm_to_vmem [thread:$0]  %s3, 2048, %s192, [#allocation6], 128, 128, 8
        $region24: #{tpu_custom_call.1} parent=11 // pred_fallthru
          _
        // Predicated region
        $region25: #{tpu_custom_call.1} parent=11 // pred_check
          %p198 = pneg %p128
        $region26: #{tpu_custom_call.1} parent=11 // pred_check_branch
          %200 = sbr.rel (%p198) target = $region28
        $region27: #{tpu_custom_call.1} parent=11 // pred_region
          _
        $region28: #{tpu_custom_call.1} parent=11 // pred_fallthru
          _
      $region12: #{tpu_custom_call.1} parent=5 // pred_fallthru
        _
      %p201 = scmp.lt.s32.totalorder %s18, 2
      // Predicated region
      $region29: #{tpu_custom_call.1} parent=5 // pred_check
        %p202 = pneg %p201
      $region30: #{tpu_custom_call.1} parent=5 // pred_check_branch
        %204 = sbr.rel (%p202) target = $region32
      $region31: #{tpu_custom_call.1} parent=5 // pred_region
        // Predicated region
        $region33: #{tpu_custom_call.1} parent=31 // pred_check
          %p205 = pneg %p38
        $region34: #{tpu_custom_call.1} parent=31 // pred_check_branch
          %207 = sbr.rel (%p205) target = $region36
        $region35: #{tpu_custom_call.1} parent=31 // pred_region
          %s208 = sand.u32 %s28, 1
          %s209 = scalar_lea.sflag [#allocation3], %s208
          %s210 = sand.u32 %s28, 1
          %s211 = smul.addr %s210, 16
          %s212 = scalar_lea.vmem [#allocation2], %s211
          %s214 = ssub.s32 256, 256
          %215 = vsyncadd %s209, %s214
          %s216 = smul.addr %s18, 2
          %s217 = smul.addr %s216, 128
          %s218 = scalar_lea.hbm %s0, %s217
          %s220 = sshll.u32 %s212, 4
          %s221 = int_to_ptr.vmem [resolvable:$true] %s220
          %223 = dma.hbm_to_vmem [thread:$0]  %s218, 256, %s221, %s209
        $region36: #{tpu_custom_call.1} parent=31 // pred_fallthru
          _
      $region32: #{tpu_custom_call.1} parent=5 // pred_fallthru
        _
      %p224 = scmp.le.s32.totalorder 1, %s18
      %p225 = scmp.lt.s32.totalorder %s18, 3
      %p226 = pnand %p224, %p225
      %p227 = pneg %p226
      // Predicated region
      $region37: #{tpu_custom_call.1} parent=5 // pred_check
        _
      $region38: #{tpu_custom_call.1} parent=5 // pred_check_branch
        %229 = sbr.rel (%p226) target = $region40
      $region39: #{tpu_custom_call.1} parent=5 // pred_region
        %s230 = ssub.s32 %s18, 1
        %s231 = sand.u32 %s31, 1
        %s232 = scalar_lea.sflag [#allocation3], %s231
        %s233 = sand.u32 %s31, 1
        %s234 = smul.addr %s233, 16
        %s235 = scalar_lea.vmem [#allocation2], %s234
        // Predicated region
        $region41: #{tpu_custom_call.1} parent=39 // pred_check
          %p236 = pneg %p44
        $region42: #{tpu_custom_call.1} parent=39 // pred_check_branch
          %238 = sbr.rel (%p236) target = $region44
        $region43: #{tpu_custom_call.1} parent=39 // pred_region
          %239 = dma.done %s232, 256
        $region44: #{tpu_custom_call.1} parent=39 // pred_fallthru
          _
        // Predicated region
        $region45: #{tpu_custom_call.1} parent=39 // pred_check
          %p240 = pneg %p65
        $region46: #{tpu_custom_call.1} parent=39 // pred_check_branch
          %242 = sbr.rel (%p240) target = $region48
        $region47: #{tpu_custom_call.1} parent=39 // pred_region
          %243 = dma.done [#allocation6], 2304
        $region48: #{tpu_custom_call.1} parent=39 // pred_fallthru
          _
        // Predicated region
        $region49: #{tpu_custom_call.1} parent=39 // pred_check
          %p244 = pneg %p107
        $region50: #{tpu_custom_call.1} parent=39 // pred_check_branch
          %246 = sbr.rel (%p244) target = $region52
        $region51: #{tpu_custom_call.1} parent=39 // pred_region
          %247 = dma.done [#allocation6], 2048
        $region52: #{tpu_custom_call.1} parent=39 // pred_fallthru
          _
        %s248 = sand.u32 %s31, 1
        %s249 = scalar_lea.sflag [#allocation3], %s248
        %s250 = sand.u32 %s31, 1
        %s251 = smul.addr %s250, 16
        %s252 = scalar_lea.vmem [#allocation2], %s251
        %p253 = pneg %p44
        %p254 = pneg %p41
        %p255 = pneg %p65
        %p256 = pneg %p62
        %p257 = pneg %p86
        %p258 = pneg %p83
        %p259 = pneg %p107
        %p260 = pneg %p104
        %p261 = pneg %p128
        %p262 = pneg %p125
        %p263 = pneg %p154
        %p264 = pneg %p151
        %s265 = sand.u32 %s141, 1
        %s266 = scalar_lea.sflag [#allocation4], %s265
        %s267 = sand.u32 %s141, 1
        %s268 = smul.addr %s267, 8
        %s269 = scalar_lea.vmem [#allocation8], %s268
        %v270 = vld [vmem:[%s235] sm:$0xff]
        %v271 = vld [vmem:[%s235 + $0x8] sm:$0xff]
        %v272 = vld [vmem:[#allocation5] sm:$0xff]
        %v273 = vld [vmem:[#allocation5 + $0x8] sm:$0xff]
        %v274 = vld [vmem:[#allocation5 + $0x10] sm:$0xff]
        %v275 = vld [vmem:[#allocation5 + $0x18] sm:$0xff]
        %v276 = vld [vmem:[#allocation5 + $0x20] sm:$0xff]
        %v277 = vld [vmem:[#allocation5 + $0x28] sm:$0xff]
        %v278 = vld [vmem:[#allocation5 + $0x30] sm:$0xff]
        %v279 = vld [vmem:[#allocation5 + $0x38] sm:$0xff]
        %v280 = vld [vmem:[#allocation5 + $0x40] sm:$0xff]
        %v281 = vld [vmem:[#allocation5 + $0x48] sm:$0xff]
        %v282 = vld [vmem:[#allocation5 + $0x50] sm:$0xff]
        %v283 = vld [vmem:[#allocation5 + $0x58] sm:$0xff]
        %v284 = vld [vmem:[#allocation5 + $0x60] sm:$0xff]
        %v285 = vld [vmem:[#allocation5 + $0x68] sm:$0xff]
        %v286 = vld [vmem:[#allocation5 + $0x70] sm:$0xff]
        %v287 = vld [vmem:[#allocation5 + $0x78] sm:$0xff]
        %v288 = vld [vmem:[#allocation5 + $0x80] sm:$0xff]
        %v289 = vld [vmem:[#allocation5 + $0x88] sm:$0xff]
        %v290 = vld [vmem:[%s2] sm:$0x1]
        %v292 = vlaneseq
        %v293 = vshrl.u32 %v292, 7
        %v294 = vsub.s32 0, %v293
        %v295 = vrot.slane %v290, %v294
        %vm297 = vcmask 130048
        %v299 = vsel %vm297, %v271, 0
        %301 = vmatprep.subr.mxu0 0.0
        %302 = vmatpush1.msra.mxu0 %v272
        %303 = vmatprep.subr.mxu0 0.0
        %304 = vmatpush1.msra.mxu0 %v273
        %305 = vmatprep.subr.mxu0 0.0
        %306 = vmatpush1.msra.mxu0 %v274
        %307 = vmatprep.subr.mxu0 0.0
        %308 = vmatpush1.msra.mxu0 %v275
        %309 = vmatprep.subr.mxu0 0.0
        %310 = vmatpush1.msra.mxu0 %v276
        %311 = vmatprep.subr.mxu0 0.0
        %312 = vmatpush1.msra.mxu0 %v277
        %313 = vmatprep.subr.mxu0 0.0
        %314 = vmatpush1.msra.mxu0 %v278
        %315 = vmatprep.subr.mxu0 0.0
        %316 = vmatpush1.msra.mxu0 %v279
        %317 = vmatprep.subr.mxu0 0.0
        %318 = vmatpush1.msra.mxu0 %v280
        %319 = vmatprep.subr.mxu0 0.0
        %320 = vmatpush1.msra.mxu0 %v281
        %321 = vmatprep.subr.mxu0 0.0
        %322 = vmatpush1.msra.mxu0 %v282
        %323 = vmatprep.subr.mxu0 0.0
        %324 = vmatpush1.msra.mxu0 %v283
        %325 = vmatprep.subr.mxu0 0.0
        %326 = vmatpush1.msra.mxu0 %v284
        %327 = vmatprep.subr.mxu0 0.0
        %328 = vmatpush1.msra.mxu0 %v285
        %329 = vmatprep.subr.mxu0 0.0
        %330 = vmatpush1.msra.mxu0 %v286
        %331 = vmatprep.subr.mxu0 0.0
        %332 = vmatpush1.msra.mxu0 %v287
        %333 = vmatprep.subr.mxu0 0.0
        %334 = vmatpush1.msra.mxu0 %v288
        %335 = vmatprep.subr.mxu0 0.0
        %336 = vmatpush1.msra.mxu0 %v289
        %337 = vmatprep.subr.mxu0 0.0
        %338 = vmatpush1.msra.mxu0 0.0
        %339 = vmatprep.subr.mxu0 0.0
        %340 = vmatpush1.msra.mxu0 0.0
        %341 = vmatprep.subr.mxu0 0.0
        %342 = vmatpush1.msra.mxu0 0.0
        %343 = vmatprep.subr.mxu0 0.0
        %344 = vmatpush1.msra.mxu0 0.0
        %345 = vmatprep.subr.mxu0 0.0
        %346 = vmatpush1.msra.mxu0 0.0
        %347 = vmatprep.subr.mxu0 0.0
        %348 = vmatpush1.msra.mxu0 0.0
        %349 = vmatprep.subr.mxu0 0.0
        %350 = vmatpush1.msra.mxu0 0.0
        %351 = vmatprep.subr.mxu0 0.0
        %352 = vmatpush1.msra.mxu0 0.0
        %353 = vmatprep.subr.mxu0 0.0
        %354 = vmatpush1.msra.mxu0 0.0
        %355 = vmatprep.subr.mxu0 0.0
        %356 = vmatpush1.msra.mxu0 0.0
        %357 = vmatprep.subr.mxu0 0.0
        %358 = vmatpush1.msra.mxu0 0.0
        %359 = vmatprep.subr.mxu0 0.0
        %360 = vmatpush1.msra.mxu0 0.0
        %361 = vmatprep.subr.mxu0 0.0
        %362 = vmatpush1.msra.mxu0 0.0
        %363 = vmatprep.subr.mxu0 0.0
        %364 = vmatpush1.msra.mxu0 0.0
        %365 = vmatprep.mubr.f32.mxu0 %v299
        %366 = vmatmul.mubr.f32.gmra.mrb[0].mxu0 %v270
        %v367 = vpop.f32.mrb[0].mxu0
        %v368 = vadd.f32 %v295, %v367
        %v369 = vpop.f32.mrb[0].mxu0
        %370 = vdwg.mxu0
        %v371 = vld [vmem:[#allocation7] sm:$0xff]
        %v372 = vld [vmem:[#allocation7 + $0x8] sm:$0xff]
        %v373 = vld [vmem:[#allocation7 + $0x10] sm:$0xff]
        %v374 = vld [vmem:[#allocation7 + $0x18] sm:$0xff]
        %v375 = vld [vmem:[#allocation7 + $0x20] sm:$0xff]
        %v376 = vld [vmem:[#allocation7 + $0x28] sm:$0xff]
        %v377 = vld [vmem:[#allocation7 + $0x30] sm:$0xff]
        %v378 = vld [vmem:[#allocation7 + $0x38] sm:$0xff]
        %v379 = vld [vmem:[#allocation7 + $0x40] sm:$0xff]
        %v380 = vld [vmem:[#allocation7 + $0x48] sm:$0xff]
        %v381 = vld [vmem:[#allocation7 + $0x50] sm:$0xff]
        %v382 = vld [vmem:[#allocation7 + $0x58] sm:$0xff]
        %v383 = vld [vmem:[#allocation7 + $0x60] sm:$0xff]
        %v384 = vld [vmem:[#allocation7 + $0x68] sm:$0xff]
        %v385 = vld [vmem:[#allocation7 + $0x70] sm:$0xff]
        %v386 = vld [vmem:[#allocation7 + $0x78] sm:$0xff]
        %v387 = vld [vmem:[%s4] sm:$0x1]
        %v389 = vlaneseq
        %v390 = vshrl.u32 %v389, 7
        %v391 = vsub.s32 0, %v390
        %v392 = vrot.slane %v387, %v391
        %394 = vmatprep.subr.mxu0 0.0
        %395 = vmatpush1.msra.mxu0 %v371
        %396 = vmatprep.subr.mxu0 0.0
        %397 = vmatpush1.msra.mxu0 %v372
        %398 = vmatprep.subr.mxu0 0.0
        %399 = vmatpush1.msra.mxu0 %v373
        %400 = vmatprep.subr.mxu0 0.0
        %401 = vmatpush1.msra.mxu0 %v374
        %402 = vmatprep.subr.mxu0 0.0
        %403 = vmatpush1.msra.mxu0 %v375
        %404 = vmatprep.subr.mxu0 0.0
        %405 = vmatpush1.msra.mxu0 %v376
        %406 = vmatprep.subr.mxu0 0.0
        %407 = vmatpush1.msra.mxu0 %v377
        %408 = vmatprep.subr.mxu0 0.0
        %409 = vmatpush1.msra.mxu0 %v378
        %410 = vmatprep.subr.mxu0 0.0
        %411 = vmatpush1.msra.mxu0 %v379
        %412 = vmatprep.subr.mxu0 0.0
        %413 = vmatpush1.msra.mxu0 %v380
        %414 = vmatprep.subr.mxu0 0.0
        %415 = vmatpush1.msra.mxu0 %v381
        %416 = vmatprep.subr.mxu0 0.0
        %417 = vmatpush1.msra.mxu0 %v382
        %418 = vmatprep.subr.mxu0 0.0
        %419 = vmatpush1.msra.mxu0 %v383
        %420 = vmatprep.subr.mxu0 0.0
        %421 = vmatpush1.msra.mxu0 %v384
        %422 = vmatprep.subr.mxu0 0.0
        %423 = vmatpush1.msra.mxu0 %v385
        %424 = vmatprep.subr.mxu0 0.0
        %425 = vmatpush1.msra.mxu0 %v386
        %426 = vmatprep.subr.mxu0 0.0
        %427 = vmatpush1.msra.mxu0 0.0
        %428 = vmatprep.subr.mxu0 0.0
        %429 = vmatpush1.msra.mxu0 0.0
        %430 = vmatprep.subr.mxu0 0.0
        %431 = vmatpush1.msra.mxu0 0.0
        %432 = vmatprep.subr.mxu0 0.0
        %433 = vmatpush1.msra.mxu0 0.0
        %434 = vmatprep.subr.mxu0 0.0
        %435 = vmatpush1.msra.mxu0 0.0
        %436 = vmatprep.subr.mxu0 0.0
        %437 = vmatpush1.msra.mxu0 0.0
        %438 = vmatprep.subr.mxu0 0.0
        %439 = vmatpush1.msra.mxu0 0.0
        %440 = vmatprep.subr.mxu0 0.0
        %441 = vmatpush1.msra.mxu0 0.0
        %442 = vmatprep.subr.mxu0 0.0
        %443 = vmatpush1.msra.mxu0 0.0
        %444 = vmatprep.subr.mxu0 0.0
        %445 = vmatpush1.msra.mxu0 0.0
        %446 = vmatprep.subr.mxu0 0.0
        %447 = vmatpush1.msra.mxu0 0.0
        %448 = vmatprep.subr.mxu0 0.0
        %449 = vmatpush1.msra.mxu0 0.0
        %450 = vmatprep.subr.mxu0 0.0
        %451 = vmatpush1.msra.mxu0 0.0
        %452 = vmatprep.subr.mxu0 0.0
        %453 = vmatpush1.msra.mxu0 0.0
        %454 = vmatprep.subr.mxu0 0.0
        %455 = vmatpush1.msra.mxu0 0.0
        %456 = vmatprep.subr.mxu0 0.0
        %457 = vmatpush1.msra.mxu0 0.0
        %458 = vmatprep.mubr.f32.mxu0 0.0
        %459 = vmatmul.mubr.f32.gmra.mrb[0].mxu0 %v368
        %v460 = vpop.f32.mrb[0].mxu0
        %v461 = vadd.f32 %v392, %v460
        %v462 = vpop.f32.mrb[0].mxu0
        %463 = vdwg.mxu0
        %464 = vst [vmem:[%s269] sm:$0xff] %v461
        %s465 = sand.u32 %s141, 1
        %s466 = scalar_lea.sflag [#allocation4], %s465
        %s467 = sand.u32 %s141, 1
        %s468 = smul.addr %s467, 8
        %s469 = scalar_lea.vmem [#allocation8], %s468
        // Predicated region
        $region53: #{tpu_custom_call.1} parent=39 // pred_check
          %p470 = pneg %p151
        $region54: #{tpu_custom_call.1} parent=39 // pred_check_branch
          %472 = sbr.rel (%p470) target = $region56
        $region55: #{tpu_custom_call.1} parent=39 // pred_region
          %s474 = ssub.s32 128, 128
          %475 = vsyncadd %s466, %s474
          %s476 = smul.addr %s23, 128
          %s477 = scalar_lea.hbm %s5, %s476
          %s479 = sshll.u32 %s469, 4
          %s480 = int_to_ptr.vmem [resolvable:$true] %s479
          %482 = dma.vmem_to_hbm [thread:$0]  %s480, 128, %s477, %s466
        $region56: #{tpu_custom_call.1} parent=39 // pred_fallthru
          _
      $region40: #{tpu_custom_call.1} parent=5 // pred_fallthru
        _
      %p483 = scmp.le.s32.totalorder 2, %s18
      // Predicated region
      $region57: #{tpu_custom_call.1} parent=5 // pred_check
        %p484 = pneg %p483
      $region58: #{tpu_custom_call.1} parent=5 // pred_check_branch
        %486 = sbr.rel (%p484) target = $region60
      $region59: #{tpu_custom_call.1} parent=5 // pred_region
        %s487 = ssub.s32 %s18, 2
        // Predicated region
        $region61: #{tpu_custom_call.1} parent=59 // pred_check
          %p488 = pneg %p157
        $region62: #{tpu_custom_call.1} parent=59 // pred_check_branch
          %490 = sbr.rel (%p488) target = $region64
        $region63: #{tpu_custom_call.1} parent=59 // pred_region
          %s491 = sand.u32 %s142, 1
          %s492 = scalar_lea.sflag [#allocation4], %s491
          %s493 = sand.u32 %s142, 1
          %s494 = smul.addr %s493, 8
          %s495 = scalar_lea.vmem [#allocation8], %s494
          %496 = dma.done %s492, 128
        $region64: #{tpu_custom_call.1} parent=59 // pred_fallthru
          _
      $region60: #{tpu_custom_call.1} parent=5 // pred_fallthru
        _
    $region6: #{tpu_custom_call.1} parent=1 // loop_footer
      %s22 = sadd.s32 1, %s18
    $region7: #{tpu_custom_call.1} parent=1 // loop_footer_branch
      %17 = sbr.rel target = $region3
    $region8: #{tpu_custom_call.1} parent=1 // loop_exit
      _
    %497 = vsyncpa [#allocation3], 1
    %s498 = scalar_lea.sflag [#allocation3], 1
    %499 = vsyncpa %s498, 1
    %500 = vsyncpa [#allocation6], 1
    %501 = vsyncpa [#allocation4], 1
    %s502 = scalar_lea.sflag [#allocation4], 1
    %503 = vsyncpa %s502, 1

</llo_original>
